<compile_context>
chip_gen: v7x
topology: tpu7x:2x2x1
jax: 0.10.0
libtpu: 0.0.40
codegen_flags: <defaults>
</compile_context>

<pallas_src>
import functools
import math

import jax
import jax.numpy as jnp
from jax import lax
from jax.experimental import pallas as pl
from jax.experimental.pallas import tpu as pltpu


def _round_up(n, m):
    return ((n + m - 1) // m) * m


def _choose_tiling(B, C, T):
    """Pick (G, b_sub, b_lane, C_pad, T_pad, R_pad) for the packed layout."""
    T_pad = _round_up(T, 128)                      # lane-dense time segments
    # ~0.5 MiB of f32 activations per block (amortizes ~0.35us/step overhead).
    budget_elems = (512 * 1024) // 4
    per_batch = max(1, C * T_pad)
    max_bpb = max(1, budget_elems // per_batch)
    divisors = [d for d in range(1, B + 1) if B % d == 0 and d <= max_bpb] or [1]
    # Prefer the largest batches-per-block that still leaves >= 2 grid steps,
    # so dimension_semantics=("parallel",) can shard across both v7x TCs.
    two_step = [d for d in divisors if (B // d) >= 2]
    bpb = max(two_step) if two_step else max(divisors)
    # Lane-pack batches until ~512 lanes, the rest become sublane groups.
    b_lane = 1
    for d in range(1, bpb + 1):
        if bpb % d == 0 and d * T_pad <= max(512, T_pad):
            b_lane = d
    b_sub = bpb // b_lane
    # Pad channels so the block row count is a multiple of 8 (native sublanes).
    C_pad = C
    while (b_sub * C_pad) % 8:
        C_pad += 1
    R_pad = _round_up(b_sub, 8)                    # padded projection rows
    return B // bpb, b_sub, b_lane, C_pad, T_pad, R_pad


def _addstcn_kernel(x_ref, convw_ref, convb_ref, prelu_ref, masks_ref,
                    wsel_ref, beff_ref, out_ref, *, num_levels, kernel_size,
                    dilation_c, seg_len):
    """One batch group: (b_sub * C_pad) rows x (b_lane * T_pad) lanes."""
    K = kernel_size
    # softmax(fs_attention) is already folded into the level-0 conv weights.
    h = x_ref[...]                                        # (BC, COLS) in vregs

    def causal_dw_conv(hin, level):
        """groups=C dilated Conv1d(padding=(K-1)*d) + Chomp1d  (causal, len T)."""
        d = dilation_c ** level
        w = convw_ref[level]                              # (BC, K)
        acc = hin * w[:, K - 1:K] + convb_ref[level]      # zero-shift tap + bias
        for k in range(K - 1):
            shift = (K - 1 - k) * d                       # static shift, > 0
            if shift >= seg_len:
                continue                                  # tap only sees causal zeros
            # In-register shifted tap: XLU rotate + precomputed per-segment
            # causal mask (zeros the first `shift` lanes of every segment,
            # which also removes cross-segment / wrap-around leakage).
            tap = pltpu.roll(hin, shift=shift, axis=1)    # h[:, t - shift]
            mask = masks_ref[level * (K - 1) + k]         # (1, COLS) of {0,1}
            acc = acc + (tap * mask) * w[:, k:k + 1]
        return acc                                        # (BC, COLS)

    # FirstBlock + TemporalBlocks (PReLU; residual from level 1 onward).
    n_pre = num_levels - 1 if num_levels > 1 else 1
    for level in range(n_pre):
        conv = causal_dw_conv(h, level)
        v = conv if level == 0 else conv + h              # FirstBlock: no residual
        alpha = prelu_ref[level]                          # (BC, 1) per-channel
        h = jnp.where(v > 0, v, alpha * v)

    # LastBlock residual; its channel-mixing Linear and the 1x1 pointwise conv
    # are folded into wsel/b_eff in the wrapper.
    if num_levels > 1:
        z = causal_dw_conv(h, num_levels - 1) + h
    else:
        z = h

    # Block-diagonal projection on the otherwise idle MXU -> lane-dense tile.
    y = jnp.dot(wsel_ref[...], z, preferred_element_type=jnp.float32)
    out_ref[...] = y + beff_ref[0, 0]                     # single unmasked store


def make_params(key, input_size, num_levels, kernel_size):
    """Deterministic synthetic parameters matching the PyTorch module shapes."""
    C, L, K = input_size, num_levels, kernel_size
    ks = jax.random.split(key, 6)
    return {
        # fs_attention = th.ones(input_size, 1)
        "attn": jnp.ones((C, 1), jnp.float32),
        # per-level depthwise Conv1d (groups=C): weight (C, 1, K) -> (L, C, K)
        "conv_w": 0.1 * jax.random.normal(ks[0], (L, C, K), jnp.float32),
        "conv_b": 0.1 * jax.random.normal(ks[1], (L, C, 1), jnp.float32),
        # PReLU(num_parameters=C), PyTorch default init 0.25 (last row unused)
        "prelu": jnp.full((L, C, 1), 0.25, jnp.float32),
        # LastBlock nn.Linear(C, C)
        "lin_w": 0.01 * jax.random.normal(ks[2], (C, C), jnp.float32),
        "lin_b": 0.1 * jax.random.normal(ks[3], (C, 1), jnp.float32),
        # pointwise nn.Conv1d(C, 1, 1): weight ~ N(0, 0.1)
        "pw_w": 0.1 * jax.random.normal(ks[4], (1, C), jnp.float32),
        "pw_b": 0.1 * jax.random.normal(ks[5], (1, 1), jnp.float32),
    }


def addstcn_forward(x, params, *, num_levels, kernel_size, dilation_c):
    B, C, T = x.shape
    L, K = num_levels, kernel_size
    G, b_sub, b_lane, C_pad, T_pad, R_pad = _choose_tiling(B, C, T)
    BC, COLS = b_sub * C_pad, b_lane * T_pad

    # ---- parameter prep (plain JAX, once per call) ---------------------------
    a = jax.nn.softmax(params["attn"], axis=0)                       # (C, 1)
    conv_w = params["conv_w"].at[0].multiply(a)                      # fold attn into level 0

    def pad_c(p):   # pad channel axis with zeros (padded channels stay 0)
        return jnp.pad(p, ((0, 0), (0, C_pad - C), (0, 0)))

    conv_w_t = jnp.tile(pad_c(conv_w), (1, b_sub, 1))                # (L, BC, K)
    conv_b_t = jnp.tile(pad_c(params["conv_b"]), (1, b_sub, 1))      # (L, BC, 1)
    prelu_t = jnp.tile(pad_c(params["prelu"]), (1, b_sub, 1))        # (L, BC, 1)

    if num_levels > 1:
        # Fold pointwise Conv1d(C,1,1) into the LastBlock Linear:
        #   pw_w @ (lin_w z + lin_b) + pw_b = w_eff z + b_eff
        w_eff = params["pw_w"] @ params["lin_w"]                     # (1, C)
        b_eff = params["pw_w"] @ params["lin_b"] + params["pw_b"]    # (1, 1)
    else:
        w_eff, b_eff = params["pw_w"], params["pw_b"]
    w_eff_p = jnp.pad(w_eff, ((0, 0), (0, C_pad - C)))               # (1, C_pad)
    sel = jnp.eye(R_pad, b_sub, dtype=jnp.float32)                   # (R_pad, b_sub)
    w_sel = jnp.einsum("rs,c->rsc", sel, w_eff_p[0]).reshape(R_pad, BC)
    b_eff = b_eff.reshape(1, 1).astype(jnp.float32)                  # SMEM scalar

    # Per-(level, tap) causal masks over the concatenated lane axis.
    t_in_seg = jnp.arange(COLS, dtype=jnp.int32) % T_pad
    mask_rows = [(t_in_seg >= (K - 1 - k) * dilation_c ** lvl).astype(jnp.float32)
                 for lvl in range(L) for k in range(K - 1)]
    tap_masks = (jnp.stack(mask_rows).reshape(len(mask_rows), 1, COLS)
                 if mask_rows else jnp.ones((1, 1, COLS), jnp.float32))
    n_taps = tap_masks.shape[0]

    # Pack batches into sublane groups and lane segments (zero padded).
    x_p = jnp.pad(x, ((0, 0), (0, C_pad - C), (0, T_pad - T)))
    x_p = x_p.reshape(G, b_sub, b_lane, C_pad, T_pad)
    x_p = x_p.transpose(0, 1, 3, 2, 4).reshape(G, BC, COLS)

    kernel = functools.partial(
        _addstcn_kernel, num_levels=num_levels, kernel_size=kernel_size,
        dilation_c=dilation_c, seg_len=T_pad)

    conv_flops = 2 * G * BC * COLS * num_levels * (2 * K + 4)
    proj_flops = 2 * G * R_pad * BC * COLS
    param_bytes = 4 * (L * BC * (K + 2) + n_taps * COLS + R_pad * BC + 1)
    block_bytes = 4 * (BC * COLS + R_pad * COLS)
    bytes_accessed = G * block_bytes + param_bytes
    # Derived VMEM budget (double-buffered blocks + resident params + headroom),
    # capped well under the 64 MiB physical VMEM of v7x.
    vmem_limit = int(min(48 << 20,
                         max(16 << 20, 4 * block_bytes + param_bytes + (2 << 20))))

    y_full = pl.pallas_call(
        kernel,
        out_shape=jax.ShapeDtypeStruct((G, R_pad, COLS), jnp.float32),
        grid=(G,),
        in_specs=[
            pl.BlockSpec((None, BC, COLS), lambda g: (g, 0, 0)),     # x slab
            pl.BlockSpec((L, BC, K), lambda g: (0, 0, 0)),           # dw conv weights
            pl.BlockSpec((L, BC, 1), lambda g: (0, 0, 0)),           # dw conv bias
            pl.BlockSpec((L, BC, 1), lambda g: (0, 0, 0)),           # PReLU alpha
            pl.BlockSpec((n_taps, 1, COLS), lambda g: (0, 0, 0)),    # causal tap masks
            pl.BlockSpec((R_pad, BC), lambda g: (0, 0)),             # folded projection
            pl.BlockSpec(memory_space=pltpu.MemorySpace.SMEM),       # b_eff scalar
        ],
        out_specs=pl.BlockSpec((None, R_pad, COLS), lambda g: (g, 0, 0)),
        compiler_params=pltpu.CompilerParams(
            dimension_semantics=("parallel",),
            vmem_limit_bytes=vmem_limit),
        cost_estimate=pl.CostEstimate(flops=conv_flops + proj_flops,
                                      transcendentals=0,
                                      bytes_accessed=bytes_accessed),
    )(x_p, conv_w_t, conv_b_t, prelu_t, tap_masks, w_sel, b_eff)

    # Undo padding/packing; PyTorch returns y1.transpose(1, 2) -> (B, T, 1).
    y = y_full[:, :b_sub, :].reshape(G, b_sub, b_lane, T_pad)[..., :T]
    return y.reshape(B, T)[:, :, None]


def addstcn_reference(x, p, *, num_levels, kernel_size, dilation_c):
    """Pure-JAX reference of the same forward pass (correctness check)."""
    B, C, T = x.shape
    K = kernel_size
    a = jax.nn.softmax(p["attn"], axis=0)
    h = x * a[None, :, :]
    for l in range(num_levels):
        d = dilation_c ** l
        pad = (K - 1) * d
        xp = jnp.pad(h, ((0, 0), (0, 0), (pad, 0)))
        conv = jnp.zeros_like(h)
        for k in range(K):
            conv = conv + (p["conv_w"][l, :, k][None, :, None]
                           * xp[:, :, k * d:k * d + T])
        conv = conv + p["conv_b"][l][None, :, :]
        if l == num_levels - 1 and num_levels > 1:
            z = conv + h
            h = (jnp.einsum("oc,bct->bot", p["lin_w"], z,
                            precision=lax.Precision.HIGHEST)
                 + p["lin_b"][None, :, :])
        else:
            v = conv if l == 0 else conv + h
            alpha = p["prelu"][l][None, :, :]
            h = jnp.where(v > 0, v, alpha * v)
    y1 = (jnp.einsum("oc,bct->bot", p["pw_w"], h,
                     precision=lax.Precision.HIGHEST) + p["pw_b"][0, 0])
    return jnp.transpose(y1, (0, 2, 1))


if __name__ == "__main__":
    # ADDSTCN(target=0, input_size=4, num_levels=3, kernel_size=2,
    #         cuda=False, dilation_c=2); x: (batch=2, input_size=4, seq=16)
    B, C, T = 2, 4, 16
    num_levels, kernel_size, dilation_c = 3, 2, 2

    key = jax.random.PRNGKey(0)
    kx, kp = jax.random.split(key)
    x = jax.random.normal(kx, (B, C, T), jnp.float32)
    params = make_params(kp, C, num_levels, kernel_size)

    out = addstcn_forward(x, params, num_levels=num_levels,
                          kernel_size=kernel_size, dilation_c=dilation_c)
    out = jax.block_until_ready(out)

    ref = addstcn_reference(x, params, num_levels=num_levels,
                            kernel_size=kernel_size, dilation_c=dilation_c)

    assert out.shape == (B, T, 1), out.shape
    max_err = float(jnp.max(jnp.abs(out - ref)))
    assert jnp.allclose(out, ref, atol=1e-4, rtol=1e-3), f"max_err={max_err}"
    print("KERNEL_OK")
</pallas_src>

<mosaic_0001>
module attributes {stable_mosaic.version = 11 : i64} {
  func.func @_addstcn_kernel(%arg0: i32, %arg1: memref<1x8x128xf32, #tpu.memory_space<vmem>>, %arg2: memref<3x8x2xf32, #tpu.memory_space<vmem>>, %arg3: memref<3x8x1xf32, #tpu.memory_space<vmem>>, %arg4: memref<3x8x1xf32, #tpu.memory_space<vmem>>, %arg5: memref<3x1x128xf32, #tpu.memory_space<vmem>>, %arg6: memref<8x8xf32, #tpu.memory_space<vmem>>, %arg7: memref<1x1xf32, #tpu.memory_space<smem>>, %arg8: memref<1x8x128xf32, #tpu.memory_space<vmem>>) attributes {dimension_semantics = [#tpu.dimension_semantics<parallel>], iteration_bounds = array<i64: 2>, scalar_prefetch = 0 : i64, scratch_operands = 0 : i64, tpu.core_type = #tpu.core_type<tc>, window_params = [{transform_indices = @transform_0, window_bounds = array<i64: 1, 8, 128>}, {pipeline_mode = #tpu.pipeline_mode<synchronous>, transform_indices = @transform_1, window_bounds = array<i64: 3, 8, 2>}, {pipeline_mode = #tpu.pipeline_mode<synchronous>, transform_indices = @transform_2, window_bounds = array<i64: 3, 8, 1>}, {pipeline_mode = #tpu.pipeline_mode<synchronous>, transform_indices = @transform_3, window_bounds = array<i64: 3, 8, 1>}, {pipeline_mode = #tpu.pipeline_mode<synchronous>, transform_indices = @transform_4, window_bounds = array<i64: 3, 1, 128>}, {pipeline_mode = #tpu.pipeline_mode<synchronous>, transform_indices = @transform_5, window_bounds = array<i64: 8, 8>}, {transform_indices = @transform_6, window_bounds = array<i64: 1, 1>}, {transform_indices = @transform_7, window_bounds = array<i64: 1, 8, 128>}]} {
    %c0 = arith.constant 0 : index
    %c0_0 = arith.constant 0 : index
    %c0_1 = arith.constant 0 : index
    %0 = vector.load %arg1[%c0, %c0_0, %c0_1] : memref<1x8x128xf32, #tpu.memory_space<vmem>>, vector<1x8x128xf32>
    %1 = vector.shape_cast %0 : vector<1x8x128xf32> to vector<8x128xf32>
    %c0_2 = arith.constant 0 : index
    %c0_3 = arith.constant 0 : index
    %c0_4 = arith.constant 0 : index
    %2 = vector.load %arg2[%c0_2, %c0_3, %c0_4] : memref<3x8x2xf32, #tpu.memory_space<vmem>>, vector<1x8x2xf32>
    %3 = vector.shape_cast %2 : vector<1x8x2xf32> to vector<8x2xf32>
    %4 = vector.extract_strided_slice %3 {offsets = [0, 1], sizes = [8, 1], strides = [1, 1]} : vector<8x2xf32> to vector<8x1xf32>
    %5 = vector.broadcast %4 : vector<8x1xf32> to vector<8x128xf32>
    %6 = arith.mulf %1, %5 : vector<8x128xf32>
    %c0_5 = arith.constant 0 : index
    %c0_6 = arith.constant 0 : index
    %c0_7 = arith.constant 0 : index
    %7 = vector.load %arg3[%c0_5, %c0_6, %c0_7] : memref<3x8x1xf32, #tpu.memory_space<vmem>>, vector<1x8x1xf32>
    %8 = vector.shape_cast %7 : vector<1x8x1xf32> to vector<8x1xf32>
    %9 = vector.broadcast %8 : vector<8x1xf32> to vector<8x128xf32>
    %10 = arith.addf %6, %9 : vector<8x128xf32>
    %c1_i32 = arith.constant 1 : i32
    %11 = tpu.dynamic_rotate %1 by %c1_i32 dim 1 : vector<8x128xf32>, i32 -> vector<8x128xf32>
    %c0_8 = arith.constant 0 : index
    %c0_9 = arith.constant 0 : index
    %c0_10 = arith.constant 0 : index
    %12 = vector.load %arg5[%c0_8, %c0_9, %c0_10] : memref<3x1x128xf32, #tpu.memory_space<vmem>>, vector<1x1x128xf32>
    %13 = vector.shape_cast %12 : vector<1x1x128xf32> to vector<1x128xf32>
    %14 = vector.broadcast %13 : vector<1x128xf32> to vector<8x128xf32>
    %15 = arith.mulf %11, %14 : vector<8x128xf32>
    %16 = vector.extract_strided_slice %3 {offsets = [0, 0], sizes = [8, 1], strides = [1, 1]} : vector<8x2xf32> to vector<8x1xf32>
    %17 = vector.broadcast %16 : vector<8x1xf32> to vector<8x128xf32>
    %18 = arith.mulf %15, %17 : vector<8x128xf32>
    %19 = arith.addf %10, %18 : vector<8x128xf32>
    %c0_11 = arith.constant 0 : index
    %c0_12 = arith.constant 0 : index
    %c0_13 = arith.constant 0 : index
    %20 = vector.load %arg4[%c0_11, %c0_12, %c0_13] : memref<3x8x1xf32, #tpu.memory_space<vmem>>, vector<1x8x1xf32>
    %21 = vector.shape_cast %20 : vector<1x8x1xf32> to vector<8x1xf32>
    %cst = arith.constant 0.000000e+00 : f32
    %22 = vector.broadcast %cst : f32 to vector<8x128xf32>
    %23 = arith.cmpf ogt, %19, %22 : vector<8x128xf32>
    %24 = vector.broadcast %21 : vector<8x1xf32> to vector<8x128xf32>
    %25 = arith.mulf %24, %19 : vector<8x128xf32>
    %26 = arith.select %23, %19, %25 : vector<8x128xi1>, vector<8x128xf32>
    %c1 = arith.constant 1 : index
    %c0_14 = arith.constant 0 : index
    %c0_15 = arith.constant 0 : index
    %27 = vector.load %arg2[%c1, %c0_14, %c0_15] : memref<3x8x2xf32, #tpu.memory_space<vmem>>, vector<1x8x2xf32>
    %28 = vector.shape_cast %27 : vector<1x8x2xf32> to vector<8x2xf32>
    %29 = vector.extract_strided_slice %28 {offsets = [0, 1], sizes = [8, 1], strides = [1, 1]} : vector<8x2xf32> to vector<8x1xf32>
    %30 = vector.broadcast %29 : vector<8x1xf32> to vector<8x128xf32>
    %31 = arith.mulf %26, %30 : vector<8x128xf32>
    %c1_16 = arith.constant 1 : index
    %c0_17 = arith.constant 0 : index
    %c0_18 = arith.constant 0 : index
    %32 = vector.load %arg3[%c1_16, %c0_17, %c0_18] : memref<3x8x1xf32, #tpu.memory_space<vmem>>, vector<1x8x1xf32>
    %33 = vector.shape_cast %32 : vector<1x8x1xf32> to vector<8x1xf32>
    %34 = vector.broadcast %33 : vector<8x1xf32> to vector<8x128xf32>
    %35 = arith.addf %31, %34 : vector<8x128xf32>
    %c2_i32 = arith.constant 2 : i32
    %36 = tpu.dynamic_rotate %26 by %c2_i32 dim 1 : vector<8x128xf32>, i32 -> vector<8x128xf32>
    %c1_19 = arith.constant 1 : index
    %c0_20 = arith.constant 0 : index
    %c0_21 = arith.constant 0 : index
    %37 = vector.load %arg5[%c1_19, %c0_20, %c0_21] : memref<3x1x128xf32, #tpu.memory_space<vmem>>, vector<1x1x128xf32>
    %38 = vector.shape_cast %37 : vector<1x1x128xf32> to vector<1x128xf32>
    %39 = vector.broadcast %38 : vector<1x128xf32> to vector<8x128xf32>
    %40 = arith.mulf %36, %39 : vector<8x128xf32>
    %41 = vector.extract_strided_slice %28 {offsets = [0, 0], sizes = [8, 1], strides = [1, 1]} : vector<8x2xf32> to vector<8x1xf32>
    %42 = vector.broadcast %41 : vector<8x1xf32> to vector<8x128xf32>
    %43 = arith.mulf %40, %42 : vector<8x128xf32>
    %44 = arith.addf %35, %43 : vector<8x128xf32>
    %45 = arith.addf %44, %26 : vector<8x128xf32>
    %c1_22 = arith.constant 1 : index
    %c0_23 = arith.constant 0 : index
    %c0_24 = arith.constant 0 : index
    %46 = vector.load %arg4[%c1_22, %c0_23, %c0_24] : memref<3x8x1xf32, #tpu.memory_space<vmem>>, vector<1x8x1xf32>
    %47 = vector.shape_cast %46 : vector<1x8x1xf32> to vector<8x1xf32>
    %cst_25 = arith.constant 0.000000e+00 : f32
    %48 = vector.broadcast %cst_25 : f32 to vector<8x128xf32>
    %49 = arith.cmpf ogt, %45, %48 : vector<8x128xf32>
    %50 = vector.broadcast %47 : vector<8x1xf32> to vector<8x128xf32>
    %51 = arith.mulf %50, %45 : vector<8x128xf32>
    %52 = arith.select %49, %45, %51 : vector<8x128xi1>, vector<8x128xf32>
    %c2 = arith.constant 2 : index
    %c0_26 = arith.constant 0 : index
    %c0_27 = arith.constant 0 : index
    %53 = vector.load %arg2[%c2, %c0_26, %c0_27] : memref<3x8x2xf32, #tpu.memory_space<vmem>>, vector<1x8x2xf32>
    %54 = vector.shape_cast %53 : vector<1x8x2xf32> to vector<8x2xf32>
    %55 = vector.extract_strided_slice %54 {offsets = [0, 1], sizes = [8, 1], strides = [1, 1]} : vector<8x2xf32> to vector<8x1xf32>
    %56 = vector.broadcast %55 : vector<8x1xf32> to vector<8x128xf32>
    %57 = arith.mulf %52, %56 : vector<8x128xf32>
    %c2_28 = arith.constant 2 : index
    %c0_29 = arith.constant 0 : index
    %c0_30 = arith.constant 0 : index
    %58 = vector.load %arg3[%c2_28, %c0_29, %c0_30] : memref<3x8x1xf32, #tpu.memory_space<vmem>>, vector<1x8x1xf32>
    %59 = vector.shape_cast %58 : vector<1x8x1xf32> to vector<8x1xf32>
    %60 = vector.broadcast %59 : vector<8x1xf32> to vector<8x128xf32>
    %61 = arith.addf %57, %60 : vector<8x128xf32>
    %c4_i32 = arith.constant 4 : i32
    %62 = tpu.dynamic_rotate %52 by %c4_i32 dim 1 : vector<8x128xf32>, i32 -> vector<8x128xf32>
    %c2_31 = arith.constant 2 : index
    %c0_32 = arith.constant 0 : index
    %c0_33 = arith.constant 0 : index
    %63 = vector.load %arg5[%c2_31, %c0_32, %c0_33] : memref<3x1x128xf32, #tpu.memory_space<vmem>>, vector<1x1x128xf32>
    %64 = vector.shape_cast %63 : vector<1x1x128xf32> to vector<1x128xf32>
    %65 = vector.broadcast %64 : vector<1x128xf32> to vector<8x128xf32>
    %66 = arith.mulf %62, %65 : vector<8x128xf32>
    %67 = vector.extract_strided_slice %54 {offsets = [0, 0], sizes = [8, 1], strides = [1, 1]} : vector<8x2xf32> to vector<8x1xf32>
    %68 = vector.broadcast %67 : vector<8x1xf32> to vector<8x128xf32>
    %69 = arith.mulf %66, %68 : vector<8x128xf32>
    %70 = arith.addf %61, %69 : vector<8x128xf32>
    %71 = arith.addf %70, %52 : vector<8x128xf32>
    %c0_34 = arith.constant 0 : index
    %c0_35 = arith.constant 0 : index
    %72 = vector.load %arg6[%c0_34, %c0_35] : memref<8x8xf32, #tpu.memory_space<vmem>>, vector<8x8xf32>
    %cst_36 = arith.constant dense<0.000000e+00> : vector<8x128xf32>
    %73 = tpu.matmul %72, %71, %cst_36 {dimension_numbers = #tpu.dot_dimension_numbers<[1], [0], [0], [1], [0, 0, 1, 1], [], []>} : vector<8x8xf32>, vector<8x128xf32>, vector<8x128xf32> -> vector<8x128xf32>
    %c0_37 = arith.constant 0 : index
    %c0_38 = arith.constant 0 : index
    %74 = memref.load %arg7[%c0_37, %c0_38] : memref<1x1xf32, #tpu.memory_space<smem>>
    %75 = vector.broadcast %74 : f32 to vector<8x128xf32>
    %76 = arith.addf %73, %75 : vector<8x128xf32>
    %c0_39 = arith.constant 0 : index
    %c0_40 = arith.constant 0 : index
    %c0_41 = arith.constant 0 : index
    %77 = vector.load %arg8[%c0_39, %c0_40, %c0_41] : memref<1x8x128xf32, #tpu.memory_space<vmem>>, vector<1x8x128xf32>
    %78 = vector.shape_cast %77 : vector<1x8x128xf32> to vector<8x128xf32>
    %79 = vector.shape_cast %76 : vector<8x128xf32> to vector<1x8x128xf32>
    tpu.vector_store %arg8[%c0_39, %c0_40, %c0_41], %79 {strides = array<i32>} : memref<1x8x128xf32, #tpu.memory_space<vmem>>, vector<1x8x128xf32>,
    return
  }
  func.func @transform_0(%arg0: i32) -> (i32, i32, i32) {
    %c0_i32 = arith.constant 0 : i32
    %c0_i32_0 = arith.constant 0 : i32
    %c0_i32_1 = arith.constant 0 : i32
    return %arg0, %c0_i32, %c0_i32_0 : i32, i32, i32
  }
  func.func @transform_1(%arg0: i32) -> (i32, i32, i32) {
    %c0_i32 = arith.constant 0 : i32
    %c0_i32_0 = arith.constant 0 : i32
    %c0_i32_1 = arith.constant 0 : i32
    %c0_i32_2 = arith.constant 0 : i32
    return %c0_i32, %c0_i32_0, %c0_i32_1 : i32, i32, i32
  }
  func.func @transform_2(%arg0: i32) -> (i32, i32, i32) {
    %c0_i32 = arith.constant 0 : i32
    %c0_i32_0 = arith.constant 0 : i32
    %c0_i32_1 = arith.constant 0 : i32
    %c0_i32_2 = arith.constant 0 : i32
    return %c0_i32, %c0_i32_0, %c0_i32_1 : i32, i32, i32
  }
  func.func @transform_3(%arg0: i32) -> (i32, i32, i32) {
    %c0_i32 = arith.constant 0 : i32
    %c0_i32_0 = arith.constant 0 : i32
    %c0_i32_1 = arith.constant 0 : i32
    %c0_i32_2 = arith.constant 0 : i32
    return %c0_i32, %c0_i32_0, %c0_i32_1 : i32, i32, i32
  }
  func.func @transform_4(%arg0: i32) -> (i32, i32, i32) {
    %c0_i32 = arith.constant 0 : i32
    %c0_i32_0 = arith.constant 0 : i32
    %c0_i32_1 = arith.constant 0 : i32
    %c0_i32_2 = arith.constant 0 : i32
    return %c0_i32, %c0_i32_0, %c0_i32_1 : i32, i32, i32
  }
  func.func @transform_5(%arg0: i32) -> (i32, i32) {
    %c0_i32 = arith.constant 0 : i32
    %c0_i32_0 = arith.constant 0 : i32
    %c0_i32_1 = arith.constant 0 : i32
    return %c0_i32, %c0_i32_0 : i32, i32
  }
  func.func @transform_6(%arg0: i32) -> (i32, i32) {
    %c0_i32 = arith.constant 0 : i32
    %c0_i32_0 = arith.constant 0 : i32
    %c0_i32_1 = arith.constant 0 : i32
    return %c0_i32, %c0_i32_0 : i32, i32
  }
  func.func @transform_7(%arg0: i32) -> (i32, i32, i32) {
    %c0_i32 = arith.constant 0 : i32
    %c0_i32_0 = arith.constant 0 : i32
    %c0_i32_1 = arith.constant 0 : i32
    return %arg0, %c0_i32, %c0_i32_0 : i32, i32, i32
  }
}

</mosaic_0001>

<llo_original>
// kernel: tpu_custom_call.1
$region0: #{tpu_custom_call.1}
  #allocation0 [shape = 'u32[]', space=smem, size = 0x4, offset = 0x4, fixed_abs, tag = 'smem constant byte address 0x4 - core index']
  #allocation1 [shape = 'u32[144,128]{1,0:T(1,128)}', space=vmem, size = 0x12000, scoped, tag = 'internal scratch']
  #allocation2 [shape = 'f32[1,1]{1,0:T(1,128)S(6)}', space=smem, size = 0x200, scoped, tag = 'scoped memory for tpu_custom_call.1']
  %s0 = inlined_call_operand.vmem [shape: f32[2,8,128], index: 0, kind: input, shape index: {}]
  %s1 = inlined_call_operand.vmem [shape: f32[3,8,2], index: 1, kind: input, shape index: {}]
  %s2 = inlined_call_operand.vmem [shape: f32[3,8,1], index: 2, kind: input, shape index: {}]
  %s3 = inlined_call_operand.vmem [shape: f32[3,8,1], index: 3, kind: input, shape index: {}]
  %s4 = inlined_call_operand.vmem [shape: f32[3,1,128], index: 4, kind: input, shape index: {}]
  %s5 = inlined_call_operand.vmem [shape: f32[8,8], index: 5, kind: input, shape index: {}]
  %s6 = inlined_call_operand.<no memory space> [shape: f32[1,1], index: 6, kind: input, shape index: {}]
  %s7 = inlined_call_operand.hbm [shape: f32[2,8,128], index: 7, kind: output, shape index: {}]
  %s8 = sld [smem:[#allocation0]]
  $region61: #{tpu_custom_call.1} parent=0
    _
  %s10 = ssub.s32 1, %s8
  %s11 = scalar_select 0, %s10, %s8
  %12 = sst [smem:[#allocation2]] %s6
  $region1: #{tpu_custom_call.1} parent=0
    #allocation3 [shape = 'u8[8192]{0}', space=vmem, size = 0x2000, scoped, tag = 'output window, operand 0']
    #allocation4 [shape = 's32[2]{0}', space=sflag, size = 0x8, scoped, tag = 'scoped memory for tpu_custom_call.1']
    %13 = vsyncpa [#allocation4], 0
    %s14 = scalar_lea.sflag [#allocation4], 1
    %15 = vsyncpa %s14, 0
    loop: start=0, step=1, limit=4
    $region2: #{tpu_custom_call.1} parent=1 // loop_pre_header
      _
    $region3: #{tpu_custom_call.1} parent=1 // loop_header
      %s17 = sphi 0, %s21
      %p18 = scmp.ge.s32.totalorder %s17, 4
      %s27 = sphi 0, %s29
      %s30 = sphi 0, %s27
      %s31 = sphi 0, %s30
      %s47 = sphi 0, %s31
      %s51 = sphi 0, %s51
      %s53 = sphi 0, %s51
      %s54 = sphi 0, %s53
      %s68 = sphi 0, %s54
      %s72 = sphi 0, %s72
      %s74 = sphi 0, %s72
      %s75 = sphi 0, %s74
      %s89 = sphi 0, %s75
      %s93 = sphi 0, %s93
      %s95 = sphi 0, %s93
      %s96 = sphi 0, %s95
      %s110 = sphi 0, %s96
      %s114 = sphi 0, %s114
      %s116 = sphi 0, %s114
      %s117 = sphi 0, %s116
      %s131 = sphi 0, %s117
      %s135 = sphi 0, %s135
      %s137 = sphi 0, %s135
      %s138 = sphi 0, %s137
      %s152 = sphi 0, %s138
      %s156 = sphi 0, %s156
      %s158 = sphi 0, %s156
      %s159 = sphi 0, %s158
      %s173 = sphi 0, %s159
      %s179 = sphi 0, %s181
      %s182 = sphi 0, %s179
      %s183 = sphi 0, %s182
      %s199 = sphi 0, %s183
    $region4: #{tpu_custom_call.1} parent=1 // loop_header_branch
      %20 = sbr.rel (%p18) target = $region8
    $region5: #{tpu_custom_call.1} parent=1 // loop_body
      %s22 = ssub.s32 %s17, 1
      %s23 = ssub.s32 %s17, 2
      %s24 = sadd.s32 %s17, 1
      %s25 = ssub.s32 %s17, %s24
      %p26 = scmp.eq.s32.totalorder %s25, 0
      %s28 = sadd.s32 %s27, 1
      %s29 = scalar_select %p26, %s27, %s28
      %p32 = pneg %p26
      %p33 = scmp.eq.s32.totalorder %s17, 1
      %p34 = por %p32, %p33
      %p35 = scmp.ne.s32.totalorder %s27, %s30
      %p36 = scmp.eq.s32.totalorder %s17, 0
      %p37 = por %p35, %p36
      %p38 = scmp.ne.s32.totalorder %s27, %s30
      %p39 = scmp.eq.s32.totalorder %s22, 1
      %p40 = por %p38, %p39
      %p41 = scmp.ne.s32.totalorder %s30, %s31
      %p42 = scmp.eq.s32.totalorder %s22, 0
      %p43 = por %p41, %p42
      %p44 = scmp.ne.s32.totalorder %s30, %s31
      %p45 = scmp.eq.s32.totalorder %s23, 1
      %p46 = por %p44, %p45
      %p48 = scmp.ne.s32.totalorder %s31, %s47
      %p49 = scmp.eq.s32.totalorder %s23, 0
      %p50 = por %p48, %p49
      %s52 = sadd.s32 %s51, 1
      %p55 = scmp.eq.s32.totalorder %s17, 1
      %p56 = scmp.ne.s32.totalorder %s51, %s53
      %p57 = scmp.eq.s32.totalorder %s17, 0
      %p58 = por %p56, %p57
      %p59 = scmp.ne.s32.totalorder %s51, %s53
      %p60 = scmp.eq.s32.totalorder %s22, 1
      %p61 = por %p59, %p60
      %p62 = scmp.ne.s32.totalorder %s53, %s54
      %p63 = scmp.eq.s32.totalorder %s22, 0
      %p64 = por %p62, %p63
      %p65 = scmp.ne.s32.totalorder %s53, %s54
      %p66 = scmp.eq.s32.totalorder %s23, 1
      %p67 = por %p65, %p66
      %p69 = scmp.ne.s32.totalorder %s54, %s68
      %p70 = scmp.eq.s32.totalorder %s23, 0
      %p71 = por %p69, %p70
      %s73 = sadd.s32 %s72, 1
      %p76 = scmp.eq.s32.totalorder %s17, 1
      %p77 = scmp.ne.s32.totalorder %s72, %s74
      %p78 = scmp.eq.s32.totalorder %s17, 0
      %p79 = por %p77, %p78
      %p80 = scmp.ne.s32.totalorder %s72, %s74
      %p81 = scmp.eq.s32.totalorder %s22, 1
      %p82 = por %p80, %p81
      %p83 = scmp.ne.s32.totalorder %s74, %s75
      %p84 = scmp.eq.s32.totalorder %s22, 0
      %p85 = por %p83, %p84
      %p86 = scmp.ne.s32.totalorder %s74, %s75
      %p87 = scmp.eq.s32.totalorder %s23, 1
      %p88 = por %p86, %p87
      %p90 = scmp.ne.s32.totalorder %s75, %s89
      %p91 = scmp.eq.s32.totalorder %s23, 0
      %p92 = por %p90, %p91
      %s94 = sadd.s32 %s93, 1
      %p97 = scmp.eq.s32.totalorder %s17, 1
      %p98 = scmp.ne.s32.totalorder %s93, %s95
      %p99 = scmp.eq.s32.totalorder %s17, 0
      %p100 = por %p98, %p99
      %p101 = scmp.ne.s32.totalorder %s93, %s95
      %p102 = scmp.eq.s32.totalorder %s22, 1
      %p103 = por %p101, %p102
      %p104 = scmp.ne.s32.totalorder %s95, %s96
      %p105 = scmp.eq.s32.totalorder %s22, 0
      %p106 = por %p104, %p105
      %p107 = scmp.ne.s32.totalorder %s95, %s96
      %p108 = scmp.eq.s32.totalorder %s23, 1
      %p109 = por %p107, %p108
      %p111 = scmp.ne.s32.totalorder %s96, %s110
      %p112 = scmp.eq.s32.totalorder %s23, 0
      %p113 = por %p111, %p112
      %s115 = sadd.s32 %s114, 1
      %p118 = scmp.eq.s32.totalorder %s17, 1
      %p119 = scmp.ne.s32.totalorder %s114, %s116
      %p120 = scmp.eq.s32.totalorder %s17, 0
      %p121 = por %p119, %p120
      %p122 = scmp.ne.s32.totalorder %s114, %s116
      %p123 = scmp.eq.s32.totalorder %s22, 1
      %p124 = por %p122, %p123
      %p125 = scmp.ne.s32.totalorder %s116, %s117
      %p126 = scmp.eq.s32.totalorder %s22, 0
      %p127 = por %p125, %p126
      %p128 = scmp.ne.s32.totalorder %s116, %s117
      %p129 = scmp.eq.s32.totalorder %s23, 1
      %p130 = por %p128, %p129
      %p132 = scmp.ne.s32.totalorder %s117, %s131
      %p133 = scmp.eq.s32.totalorder %s23, 0
      %p134 = por %p132, %p133
      %s136 = sadd.s32 %s135, 1
      %p139 = scmp.eq.s32.totalorder %s17, 1
      %p140 = scmp.ne.s32.totalorder %s135, %s137
      %p141 = scmp.eq.s32.totalorder %s17, 0
      %p142 = por %p140, %p141
      %p143 = scmp.ne.s32.totalorder %s135, %s137
      %p144 = scmp.eq.s32.totalorder %s22, 1
      %p145 = por %p143, %p144
      %p146 = scmp.ne.s32.totalorder %s137, %s138
      %p147 = scmp.eq.s32.totalorder %s22, 0
      %p148 = por %p146, %p147
      %p149 = scmp.ne.s32.totalorder %s137, %s138
      %p150 = scmp.eq.s32.totalorder %s23, 1
      %p151 = por %p149, %p150
      %p153 = scmp.ne.s32.totalorder %s138, %s152
      %p154 = scmp.eq.s32.totalorder %s23, 0
      %p155 = por %p153, %p154
      %s157 = sadd.s32 %s156, 1
      %p160 = scmp.eq.s32.totalorder %s17, 1
      %p161 = scmp.ne.s32.totalorder %s156, %s158
      %p162 = scmp.eq.s32.totalorder %s17, 0
      %p163 = por %p161, %p162
      %p164 = scmp.ne.s32.totalorder %s156, %s158
      %p165 = scmp.eq.s32.totalorder %s22, 1
      %p166 = por %p164, %p165
      %p167 = scmp.ne.s32.totalorder %s158, %s159
      %p168 = scmp.eq.s32.totalorder %s22, 0
      %p169 = por %p167, %p168
      %p170 = scmp.ne.s32.totalorder %s158, %s159
      %p171 = scmp.eq.s32.totalorder %s23, 1
      %p172 = por %p170, %p171
      %p174 = scmp.ne.s32.totalorder %s159, %s173
      %p175 = scmp.eq.s32.totalorder %s23, 0
      %p176 = por %p174, %p175
      %s177 = ssub.s32 %s17, %s24
      %p178 = scmp.eq.s32.totalorder %s177, 0
      %s180 = sadd.s32 %s179, 1
      %s181 = scalar_select %p178, %s179, %s180
      %p184 = pneg %p178
      %p185 = scmp.eq.s32.totalorder %s17, 1
      %p186 = por %p184, %p185
      %p187 = scmp.ne.s32.totalorder %s179, %s182
      %p188 = scmp.eq.s32.totalorder %s17, 0
      %p189 = por %p187, %p188
      %p190 = scmp.ne.s32.totalorder %s179, %s182
      %p191 = scmp.eq.s32.totalorder %s22, 1
      %p192 = por %p190, %p191
      %p193 = scmp.ne.s32.totalorder %s182, %s183
      %p194 = scmp.eq.s32.totalorder %s22, 0
      %p195 = por %p193, %p194
      %p196 = scmp.ne.s32.totalorder %s182, %s183
      %p197 = scmp.eq.s32.totalorder %s23, 1
      %p198 = por %p196, %p197
      %p200 = scmp.ne.s32.totalorder %s183, %s199
      %p201 = scmp.eq.s32.totalorder %s23, 0
      %p202 = por %p200, %p201
      %p203 = scmp.le.s32.totalorder 1, %s17
      %p204 = scmp.lt.s32.totalorder %s17, 3
      %p205 = pnand %p203, %p204
      %p206 = pneg %p205
      // Predicated region
      $region9: #{tpu_custom_call.1} parent=5 // pred_check
        _
      $region10: #{tpu_custom_call.1} parent=5 // pred_check_branch
        %208 = sbr.rel (%p205) target = $region12
      $region11: #{tpu_custom_call.1} parent=5 // pred_region
        %s209 = ssub.s32 %s17, 1
        // Predicated region
        $region13: #{tpu_custom_call.1} parent=11 // pred_check
          %p210 = pneg %p64
        $region14: #{tpu_custom_call.1} parent=11 // pred_check_branch
          %212 = sbr.rel (%p210) target = $region16
        $region15: #{tpu_custom_call.1} parent=11 // pred_region
          _
        $region16: #{tpu_custom_call.1} parent=11 // pred_fallthru
          _
        // Predicated region
        $region17: #{tpu_custom_call.1} parent=11 // pred_check
          %p213 = pneg %p85
        $region18: #{tpu_custom_call.1} parent=11 // pred_check_branch
          %215 = sbr.rel (%p213) target = $region20
        $region19: #{tpu_custom_call.1} parent=11 // pred_region
          _
        $region20: #{tpu_custom_call.1} parent=11 // pred_fallthru
          _
        // Predicated region
        $region21: #{tpu_custom_call.1} parent=11 // pred_check
          %p216 = pneg %p106
        $region22: #{tpu_custom_call.1} parent=11 // pred_check_branch
          %218 = sbr.rel (%p216) target = $region24
        $region23: #{tpu_custom_call.1} parent=11 // pred_region
          _
        $region24: #{tpu_custom_call.1} parent=11 // pred_fallthru
          _
        // Predicated region
        $region25: #{tpu_custom_call.1} parent=11 // pred_check
          %p219 = pneg %p127
        $region26: #{tpu_custom_call.1} parent=11 // pred_check_branch
          %221 = sbr.rel (%p219) target = $region28
        $region27: #{tpu_custom_call.1} parent=11 // pred_region
          _
        $region28: #{tpu_custom_call.1} parent=11 // pred_fallthru
          _
        // Predicated region
        $region29: #{tpu_custom_call.1} parent=11 // pred_check
          %p222 = pneg %p148
        $region30: #{tpu_custom_call.1} parent=11 // pred_check_branch
          %224 = sbr.rel (%p222) target = $region32
        $region31: #{tpu_custom_call.1} parent=11 // pred_region
          _
        $region32: #{tpu_custom_call.1} parent=11 // pred_fallthru
          _
        // Predicated region
        $region33: #{tpu_custom_call.1} parent=11 // pred_check
          %p225 = pneg %p169
        $region34: #{tpu_custom_call.1} parent=11 // pred_check_branch
          %227 = sbr.rel (%p225) target = $region36
        $region35: #{tpu_custom_call.1} parent=11 // pred_region
          _
        $region36: #{tpu_custom_call.1} parent=11 // pred_fallthru
          _
      $region12: #{tpu_custom_call.1} parent=5 // pred_fallthru
        _
      %p228 = scmp.lt.s32.totalorder %s17, 2
      // Predicated region
      $region37: #{tpu_custom_call.1} parent=5 // pred_check
        %p229 = pneg %p228
      $region38: #{tpu_custom_call.1} parent=5 // pred_check_branch
        %231 = sbr.rel (%p229) target = $region40
      $region39: #{tpu_custom_call.1} parent=5 // pred_region
        // Predicated region
        $region41: #{tpu_custom_call.1} parent=39 // pred_check
          %p232 = pneg %p37
        $region42: #{tpu_custom_call.1} parent=39 // pred_check_branch
          %234 = sbr.rel (%p232) target = $region44
        $region43: #{tpu_custom_call.1} parent=39 // pred_region
          %p235 = scmp.lt.s32.totalorder %s17, 1
          %s236 = scalar_select %p235, %s17, 1
          %s237 = smul.addr %s236, 8
          %s238 = scalar_lea.vmem %s0, %s237
        $region44: #{tpu_custom_call.1} parent=39 // pred_fallthru
          _
      $region40: #{tpu_custom_call.1} parent=5 // pred_fallthru
        _
      %p239 = scmp.le.s32.totalorder 1, %s17
      %p240 = scmp.lt.s32.totalorder %s17, 3
      %p241 = pnand %p239, %p240
      %p242 = pneg %p241
      // Predicated region
      $region45: #{tpu_custom_call.1} parent=5 // pred_check
        _
      $region46: #{tpu_custom_call.1} parent=5 // pred_check_branch
        %244 = sbr.rel (%p241) target = $region48
      $region47: #{tpu_custom_call.1} parent=5 // pred_region
        %s245 = ssub.s32 %s17, 1
        %p246 = scmp.lt.s32.totalorder %s22, 1
        %s247 = scalar_select %p246, %s22, 1
        %s248 = smul.addr %s247, 8
        %s249 = scalar_lea.vmem %s0, %s248
        %p250 = pneg %p43
        %p251 = pneg %p40
        %p252 = pneg %p64
        %p253 = pneg %p61
        %p254 = pneg %p85
        %p255 = pneg %p82
        %p256 = pneg %p106
        %p257 = pneg %p103
        %p258 = pneg %p127
        %p259 = pneg %p124
        %p260 = pneg %p148
        %p261 = pneg %p145
        %p262 = pneg %p169
        %p263 = pneg %p166
        %p264 = pneg %p195
        %p265 = pneg %p192
        %s266 = sand.u32 %s182, 1
        %s267 = scalar_lea.sflag [#allocation4], %s266
        %s268 = sand.u32 %s182, 1
        %s269 = smul.addr %s268, 8
        %s270 = scalar_lea.vmem [#allocation3], %s269
        %p271 = scmp.lt.s32.totalorder %s22, 1
        %s272 = scalar_select %p271, %s22, 1
        %s273 = smul.addr %s272, 8
        %s274 = scalar_lea.vmem %s0, %s273
        %v275 = vld [vmem:[%s274] sm:$0xff]
        %v276 = vld [vmem:[%s1] sm:$0xff]
        %278 = vset.pattern.permute.xlu0 1
        %279 = vperm.xlu0 %278, %v276
        %v280 = vpop.permute.xlu0 %279
        %v282 = vmul.f32 %v275, %v280
        %v283 = vld [vmem:[%s2] sm:$0xff]
        %285 = vset.pattern.permute.xlu0 0
        %286 = vperm.xlu0 %285, %v283
        %v287 = vpop.permute.xlu0 %286
        %v289 = vadd.f32 %v282, %v287
        %290 = vrot.lane.b32.xlu0 %v275, 1
        %v291 = vpop.permute.xlu0 %290
        %v292 = vld [vmem:[%s4] sm:$0x1]
        %v294 = vlaneseq
        %v295 = vshrl.u32 %v294, 7
        %v296 = vsub.s32 0, %v295
        %v297 = vrot.slane %v292, %v296
        %v299 = vmul.f32 %v291, %v297
        %300 = vset.pattern.permute.xlu0 0
        %301 = vperm.xlu0 %300, %v276
        %v302 = vpop.permute.xlu0 %301
        %v304 = vmul.f32 %v299, %v302
        %v305 = vadd.f32 %v289, %v304
        %v306 = vld [vmem:[%s3] sm:$0xff]
        %vm307 = vcmp.gt.f32.partialorder %v305, 0.0
        %309 = vset.pattern.permute.xlu0 0
        %310 = vperm.xlu0 %309, %v306
        %v311 = vpop.permute.xlu0 %310
        %v313 = vmul.f32 %v311, %v305
        %v314 = vsel %vm307, %v305, %v313
        %s315 = scalar_lea.vmem %s1, 8
        %v316 = vld [vmem:[%s315] sm:$0xff]
        %318 = vset.pattern.permute.xlu0 1
        %319 = vperm.xlu0 %318, %v316
        %v320 = vpop.permute.xlu0 %319
        %v322 = vmul.f32 %v314, %v320
        %s323 = scalar_lea.vmem %s2, 8
        %v324 = vld [vmem:[%s323] sm:$0xff]
        %326 = vset.pattern.permute.xlu0 0
        %327 = vperm.xlu0 %326, %v324
        %v328 = vpop.permute.xlu0 %327
        %v330 = vadd.f32 %v322, %v328
        %331 = vrot.lane.b32.xlu0 %v314, 2
        %v332 = vpop.permute.xlu0 %331
        %s333 = scalar_lea.vmem %s4, 1
        %v334 = vld [vmem:[%s333] sm:$0x1]
        %v336 = vlaneseq
        %v337 = vshrl.u32 %v336, 7
        %v338 = vsub.s32 0, %v337
        %v339 = vrot.slane %v334, %v338
        %v341 = vmul.f32 %v332, %v339
        %342 = vset.pattern.permute.xlu0 0
        %343 = vperm.xlu0 %342, %v316
        %v344 = vpop.permute.xlu0 %343
        %v346 = vmul.f32 %v341, %v344
        %v347 = vadd.f32 %v330, %v346
        %v348 = vadd.f32 %v347, %v314
        %s349 = scalar_lea.vmem %s3, 8
        %v350 = vld [vmem:[%s349] sm:$0xff]
        %vm351 = vcmp.gt.f32.partialorder %v348, 0.0
        %353 = vset.pattern.permute.xlu0 0
        %354 = vperm.xlu0 %353, %v350
        %v355 = vpop.permute.xlu0 %354
        %v357 = vmul.f32 %v355, %v348
        %v358 = vsel %vm351, %v348, %v357
        %s359 = scalar_lea.vmem %s1, 16
        %v360 = vld [vmem:[%s359] sm:$0xff]
        %362 = vset.pattern.permute.xlu0 1
        %363 = vperm.xlu0 %362, %v360
        %v364 = vpop.permute.xlu0 %363
        %v366 = vmul.f32 %v358, %v364
        %s367 = scalar_lea.vmem %s2, 16
        %v368 = vld [vmem:[%s367] sm:$0xff]
        %370 = vset.pattern.permute.xlu0 0
        %371 = vperm.xlu0 %370, %v368
        %v372 = vpop.permute.xlu0 %371
        %v374 = vadd.f32 %v366, %v372
        %375 = vrot.lane.b32.xlu0 %v358, 4
        %v376 = vpop.permute.xlu0 %375
        %s377 = scalar_lea.vmem %s4, 2
        %v378 = vld [vmem:[%s377] sm:$0x1]
        %v380 = vlaneseq
        %v381 = vshrl.u32 %v380, 7
        %v382 = vsub.s32 0, %v381
        %v383 = vrot.slane %v378, %v382
        %v385 = vmul.f32 %v376, %v383
        %386 = vset.pattern.permute.xlu0 0
        %387 = vperm.xlu0 %386, %v360
        %v388 = vpop.permute.xlu0 %387
        %v390 = vmul.f32 %v385, %v388
        %v391 = vadd.f32 %v374, %v390
        %v392 = vadd.f32 %v391, %v358
        %v393 = vld [vmem:[%s5] sm:$0xff]
        %s394 = sld [smem:[#allocation2]]
        %v395 = vstv %s394
        %vm396 = vcmask 64512
        %v398 = vsel %vm396, %v393, 0
        %400 = vmatprep.subr.mxu0 0.0
        %401 = vmatpush1.msra.mxu0 %v392
        %402 = vmatprep.subr.mxu0 0.0
        %403 = vmatpush1.msra.mxu0 0.0
        %404 = vmatprep.subr.mxu0 0.0
        %405 = vmatpush1.msra.mxu0 0.0
        %406 = vmatprep.subr.mxu0 0.0
        %407 = vmatpush1.msra.mxu0 0.0
        %408 = vmatprep.subr.mxu0 0.0
        %409 = vmatpush1.msra.mxu0 0.0
        %410 = vmatprep.subr.mxu0 0.0
        %411 = vmatpush1.msra.mxu0 0.0
        %412 = vmatprep.subr.mxu0 0.0
        %413 = vmatpush1.msra.mxu0 0.0
        %414 = vmatprep.subr.mxu0 0.0
        %415 = vmatpush1.msra.mxu0 0.0
        %416 = vmatprep.subr.mxu0 0.0
        %417 = vmatpush1.msra.mxu0 0.0
        %418 = vmatprep.subr.mxu0 0.0
        %419 = vmatpush1.msra.mxu0 0.0
        %420 = vmatprep.subr.mxu0 0.0
        %421 = vmatpush1.msra.mxu0 0.0
        %422 = vmatprep.subr.mxu0 0.0
        %423 = vmatpush1.msra.mxu0 0.0
        %424 = vmatprep.subr.mxu0 0.0
        %425 = vmatpush1.msra.mxu0 0.0
        %426 = vmatprep.subr.mxu0 0.0
        %427 = vmatpush1.msra.mxu0 0.0
        %428 = vmatprep.subr.mxu0 0.0
        %429 = vmatpush1.msra.mxu0 0.0
        %430 = vmatprep.subr.mxu0 0.0
        %431 = vmatpush1.msra.mxu0 0.0
        %432 = vmatprep.subr.mxu0 0.0
        %433 = vmatpush1.msra.mxu0 0.0
        %434 = vmatprep.subr.mxu0 0.0
        %435 = vmatpush1.msra.mxu0 0.0
        %436 = vmatprep.subr.mxu0 0.0
        %437 = vmatpush1.msra.mxu0 0.0
        %438 = vmatprep.subr.mxu0 0.0
        %439 = vmatpush1.msra.mxu0 0.0
        %440 = vmatprep.subr.mxu0 0.0
        %441 = vmatpush1.msra.mxu0 0.0
        %442 = vmatprep.subr.mxu0 0.0
        %443 = vmatpush1.msra.mxu0 0.0
        %444 = vmatprep.subr.mxu0 0.0
        %445 = vmatpush1.msra.mxu0 0.0
        %446 = vmatprep.subr.mxu0 0.0
        %447 = vmatpush1.msra.mxu0 0.0
        %448 = vmatprep.subr.mxu0 0.0
        %449 = vmatpush1.msra.mxu0 0.0
        %450 = vmatprep.subr.mxu0 0.0
        %451 = vmatpush1.msra.mxu0 0.0
        %452 = vmatprep.subr.mxu0 0.0
        %453 = vmatpush1.msra.mxu0 0.0
        %454 = vmatprep.subr.mxu0 0.0
        %455 = vmatpush1.msra.mxu0 0.0
        %456 = vmatprep.subr.mxu0 0.0
        %457 = vmatpush1.msra.mxu0 0.0
        %458 = vmatprep.subr.mxu0 0.0
        %459 = vmatpush1.msra.mxu0 0.0
        %460 = vmatprep.subr.mxu0 0.0
        %461 = vmatpush1.msra.mxu0 0.0
        %462 = vmatprep.subr.mxu0 0.0
        %463 = vmatpush1.msra.mxu0 0.0
        %464 = vmatprep.mubr.f32.mxu0 0.0
        %465 = vmatmul.mubr.f32.gmra.mrb[0].mxu0 %v398
        %v466 = vpop.f32.mrb[0].mxu0
        %v467 = vadd.f32 %v395, %v466
        %v468 = vpop.f32.mrb[0].mxu0
        %469 = vdwg.mxu0
        %470 = vst [vmem:[%s270] sm:$0xff] %v467
        %s471 = sand.u32 %s182, 1
        %s472 = scalar_lea.sflag [#allocation4], %s471
        %s473 = sand.u32 %s182, 1
        %s474 = smul.addr %s473, 8
        %s475 = scalar_lea.vmem [#allocation3], %s474
        // Predicated region
        $region49: #{tpu_custom_call.1} parent=47 // pred_check
          %p476 = pneg %p192
        $region50: #{tpu_custom_call.1} parent=47 // pred_check_branch
          %478 = sbr.rel (%p476) target = $region52
        $region51: #{tpu_custom_call.1} parent=47 // pred_region
          %s480 = ssub.s32 128, 128
          %481 = vsyncadd %s472, %s480
          %s482 = smul.addr %s22, 128
          %s483 = scalar_lea.hbm %s7, %s482
          %s485 = sshll.u32 %s475, 4
          %s486 = int_to_ptr.vmem [resolvable:$true] %s485
          %488 = dma.vmem_to_hbm [thread:$0]  %s486, 128, %s483, %s472
        $region52: #{tpu_custom_call.1} parent=47 // pred_fallthru
          _
      $region48: #{tpu_custom_call.1} parent=5 // pred_fallthru
        _
      %p489 = scmp.le.s32.totalorder 2, %s17
      // Predicated region
      $region53: #{tpu_custom_call.1} parent=5 // pred_check
        %p490 = pneg %p489
      $region54: #{tpu_custom_call.1} parent=5 // pred_check_branch
        %492 = sbr.rel (%p490) target = $region56
      $region55: #{tpu_custom_call.1} parent=5 // pred_region
        %s493 = ssub.s32 %s17, 2
        // Predicated region
        $region57: #{tpu_custom_call.1} parent=55 // pred_check
          %p494 = pneg %p198
        $region58: #{tpu_custom_call.1} parent=55 // pred_check_branch
          %496 = sbr.rel (%p494) target = $region60
        $region59: #{tpu_custom_call.1} parent=55 // pred_region
          %s497 = sand.u32 %s183, 1
          %s498 = scalar_lea.sflag [#allocation4], %s497
          %s499 = sand.u32 %s183, 1
          %s500 = smul.addr %s499, 8
          %s501 = scalar_lea.vmem [#allocation3], %s500
          %502 = dma.done %s498, 128
        $region60: #{tpu_custom_call.1} parent=55 // pred_fallthru
          _
      $region56: #{tpu_custom_call.1} parent=5 // pred_fallthru
        _
    $region6: #{tpu_custom_call.1} parent=1 // loop_footer
      %s21 = sadd.s32 1, %s17
    $region7: #{tpu_custom_call.1} parent=1 // loop_footer_branch
      %16 = sbr.rel target = $region3
    $region8: #{tpu_custom_call.1} parent=1 // loop_exit
      _
    %503 = vsyncpa [#allocation4], 1
    %s504 = scalar_lea.sflag [#allocation4], 1
    %505 = vsyncpa %s504, 1

</llo_original>
